<compile_context>
chip_gen: v5e
topology: v5e:2x2
jax: 0.10.0
libtpu: 0.0.40
codegen_flags: <defaults>
</compile_context>

<pallas_src>
import jax
import jax.numpy as jnp
from jax.experimental import pallas as pl
from jax.experimental.pallas import tpu as pltpu


# ------------------------- positional encoding (matches the PyTorch module) ---

def get_position_encoding(seq_len: int, d_model: int) -> jnp.ndarray:
    even_i = jnp.arange(0, d_model, 2, dtype=jnp.float32)
    denominator = jnp.power(10000.0, even_i / d_model)
    position = jnp.arange(seq_len, dtype=jnp.float32).reshape(seq_len, 1)
    even_pe = jnp.sin(position / denominator)
    odd_pe = jnp.cos(position / denominator)
    stacked = jnp.stack([even_pe, odd_pe], axis=2)            # (S, D/2, 2)
    return stacked.reshape(seq_len, d_model)                  # (S, D)


# ------------------------- kernels ---------------------------------------------

def _vmem_table_kernel(ids_ref, table_ref, pe_ref, out_ref, row_buf):
    """Fast path: whole word table resident in VMEM.

    ids_ref : (B*S,) int32 SMEM (scalar prefetch)
    table_ref: (V, D) f32 VMEM (constant index_map -> fetched once, reused)
    pe_ref  : (S, D) f32 VMEM (constant index_map)
    out_ref : (B_TILE, S, D) f32 VMEM output block
    row_buf : (B_TILE*S, D) f32 VMEM scratch for the gathered rows
    """
    bt_idx = pl.program_id(0)
    BT, S, D = out_ref.shape
    base = bt_idx * BT * S

    # Gather rows with in-VMEM dynamic slices (no HBM row DMAs, no one-hot/MXU).
    # TODO(synk): switch to lax.fori_loop for very large B_TILE*S tiles.
    for r in range(BT * S):
        tok = ids_ref[base + r]                               # scalar read from SMEM
        row_buf[pl.ds(r, 1), :] = table_ref[pl.ds(tok, 1), :]

    pe = pe_ref[...]                                          # (S, D), hoisted once
    for bi in range(BT):
        out_ref[bi] = row_buf[pl.ds(bi * S, S), :] + pe


def _hbm_gather_kernel(ids_ref, table_hbm, pe_ref, out_ref, row_buf, sem):
    """Large-vocab path: word table stays in HBM; gather only the touched rows.

    ids_ref : (B*S,) int32 SMEM (scalar prefetch)
    table_hbm: (V, D) f32 HBM (memory_space=pl.ANY, manual row-gather DMA)
    pe_ref  : (S, D) f32 VMEM
    out_ref : (B_TILE, S, D) f32 VMEM output block
    row_buf : (B_TILE*S, D) f32 VMEM scratch
    sem     : (1,) shared DMA semaphore
    """
    bt_idx = pl.program_id(0)
    BT, S, D = out_ref.shape
    base = bt_idx * BT * S

    # Issue every row-gather DMA for this tile before the first wait so all
    # SMEM id reads stay ahead of any .wait() and the copies overlap in flight.
    copies = []
    for r in range(BT * S):
        tok = ids_ref[base + r]
        # NOTE: out-of-range ids are not range-checked (nn.Embedding would raise).
        cp = pltpu.make_async_copy(
            table_hbm.at[pl.ds(tok, 1), :],                   # (1, D) row in HBM
            row_buf.at[pl.ds(r, 1), :],                       # (1, D) VMEM slot
            sem.at[0],                                        # shared semaphore
        )
        cp.start()
        copies.append(cp)
    for cp in copies:
        cp.wait()

    pe = pe_ref[...]
    for bi in range(BT):
        out_ref[bi] = row_buf[pl.ds(bi * S, S), :] + pe


# ------------------------- wrapper ----------------------------------------------

def position_embedding_fixed_weights(ids, word_table, pe, *,
                                     vmem_table_limit_bytes=16 * 1024 * 1024,
                                     force_hbm_gather=False):
    """ids: (B, S) int; word_table: (V, D); pe: (S, D) -> (B, S, D) f32."""
    B, S = ids.shape
    V, D = word_table.shape
    assert pe.shape == (S, D)

    ids_flat = ids.reshape(B * S).astype(jnp.int32)           # 1-D SMEM prefetch
    word_table = word_table.astype(jnp.float32)
    pe = pe.astype(jnp.float32)

    table_bytes = V * D * 4
    use_vmem_table = (table_bytes <= vmem_table_limit_bytes) and not force_hbm_gather

    # ---- batch-tile selection -------------------------------------------------
    # VMEM path: aim for ~0.5 MiB output blocks (amortize ~0.35us/step overhead).
    # HBM path: cap rows/step so at most ~32 row DMAs are in flight at once.
    max_rows = 256 if use_vmem_table else 32
    target_rows = max(1, min(max_rows, (512 * 1024) // (D * 4)))
    bt = max(1, min(B, target_rows // max(S, 1)))
    if B >= 2:
        bt = max(1, min(bt, B // 2))      # keep >= 2 grid steps (v7x megacore)
    while B % bt != 0:                    # keep tiling exact (no remainder step)
        bt -= 1
    grid = (B // bt,)

    # ---- VMEM budget (v7x 64 MiB physical is the binding generation) ----------
    out_block_bytes = bt * S * D * 4
    pe_bytes = S * D * 4
    row_buf_bytes = bt * S * D * 4
    est = (2 * out_block_bytes + 2 * pe_bytes + row_buf_bytes
           + (2 * table_bytes if use_vmem_table else 0))
    vmem_limit = int(max(est + (4 << 20), 16 << 20))

    if use_vmem_table:
        kernel = _vmem_table_kernel
        table_spec = pl.BlockSpec((V, D), lambda i, ids: (0, 0))   # resident, fetched once
        scratch = [pltpu.VMEM((bt * S, D), jnp.float32)]
    else:
        kernel = _hbm_gather_kernel
        table_spec = pl.BlockSpec(memory_space=pl.ANY)             # stays in HBM
        scratch = [pltpu.VMEM((bt * S, D), jnp.float32),
                   pltpu.SemaphoreType.DMA((1,))]

    grid_spec = pltpu.PrefetchScalarGridSpec(
        num_scalar_prefetch=1,                                     # ids -> SMEM
        grid=grid,
        in_specs=[table_spec,
                  pl.BlockSpec((S, D), lambda i, ids: (0, 0))],    # PE reused every step
        out_specs=pl.BlockSpec((bt, S, D), lambda i, ids: (i, 0, 0)),
        scratch_shapes=scratch,
    )
    return pl.pallas_call(
        kernel,
        out_shape=jax.ShapeDtypeStruct((B, S, D), jnp.float32),
        grid_spec=grid_spec,
        compiler_params=pltpu.CompilerParams(
            dimension_semantics=("parallel",),                     # shard batch tiles across TCs
            vmem_limit_bytes=vmem_limit,
        ),
    )(ids_flat, word_table, pe)


if __name__ == "__main__":
    key = jax.random.PRNGKey(0)
    k_ids, k_emb = jax.random.split(key)

    def run_and_check(vocab_size, output_dim, sequence_length, batch,
                      force_hbm_gather=False):
        word_table = jax.random.normal(
            k_emb, (vocab_size, output_dim), dtype=jnp.float32)
        pe = get_position_encoding(sequence_length, output_dim)
        ids = jax.random.randint(
            k_ids, (batch, sequence_length), 0, vocab_size, dtype=jnp.int32)

        out = jax.block_until_ready(
            position_embedding_fixed_weights(
                ids, word_table, pe, force_hbm_gather=force_hbm_gather))

        ref = word_table[ids] + pe[None, :, :]
        assert out.shape == (batch, sequence_length, output_dim)
        assert jnp.allclose(out, ref, atol=1e-5, rtol=1e-5), (
            "mismatch", vocab_size, output_dim, force_hbm_gather)

    # Module-consistent small shapes (VMEM-resident-table fast path, narrow D).
    run_and_check(vocab_size=50, output_dim=32, sequence_length=8, batch=2)
    # Lane-dense config (D multiple of 128), fast path.
    run_and_check(vocab_size=64, output_dim=128, sequence_length=8, batch=2)
    # Exercise the large-vocab HBM row-gather path at a small shape.
    run_and_check(vocab_size=64, output_dim=128, sequence_length=8, batch=2,
                  force_hbm_gather=True)

    print("KERNEL_OK")
</pallas_src>

<mosaic_0001>
module attributes {stable_mosaic.version = 11 : i64} {
  func.func @_vmem_table_kernel(%arg0: i32, %arg1: memref<16xi32, #tpu.memory_space<smem>>, %arg2: memref<50x32xf32, #tpu.memory_space<vmem>>, %arg3: memref<8x32xf32, #tpu.memory_space<vmem>>, %arg4: memref<1x8x32xf32, #tpu.memory_space<vmem>>, %arg5: memref<8x32xf32, #tpu.memory_space<vmem>>) attributes {dimension_semantics = [#tpu.dimension_semantics<parallel>], iteration_bounds = array<i64: 2>, scalar_prefetch = 1 : i64, scratch_operands = 1 : i64, tpu.core_type = #tpu.core_type<tc>, window_params = [{pipeline_mode = #tpu.pipeline_mode<synchronous>, transform_indices = @transform_0, window_bounds = array<i64: 50, 32>}, {pipeline_mode = #tpu.pipeline_mode<synchronous>, transform_indices = @transform_1, window_bounds = array<i64: 8, 32>}, {transform_indices = @transform_2, window_bounds = array<i64: 1, 8, 32>}]} {
    %c1_i32 = arith.constant 1 : i32
    %0 = arith.muli %arg0, %c1_i32 : i32
    %c8_i32 = arith.constant 8 : i32
    %1 = arith.muli %0, %c8_i32 : i32
    %c0_i32 = arith.constant 0 : i32
    %2 = arith.addi %1, %c0_i32 : i32
    %3 = arith.index_cast %2 : i32 to index
    %4 = memref.load %arg1[%3] : memref<16xi32, #tpu.memory_space<smem>>
    %5 = arith.index_cast %4 : i32 to index
    %c0 = arith.constant 0 : index
    %6 = vector.load %arg2[%5, %c0] : memref<50x32xf32, #tpu.memory_space<vmem>>, vector<1x32xf32>
    %c0_0 = arith.constant 0 : index
    %c0_1 = arith.constant 0 : index
    %7 = vector.load %arg5[%c0_0, %c0_1] : memref<8x32xf32, #tpu.memory_space<vmem>>, vector<1x32xf32>
    tpu.vector_store %arg5[%c0_0, %c0_1], %6 {strides = array<i32>} : memref<8x32xf32, #tpu.memory_space<vmem>>, vector<1x32xf32>,
    %c1_i32_2 = arith.constant 1 : i32
    %8 = arith.addi %1, %c1_i32_2 : i32
    %9 = arith.index_cast %8 : i32 to index
    %10 = memref.load %arg1[%9] : memref<16xi32, #tpu.memory_space<smem>>
    %11 = arith.index_cast %10 : i32 to index
    %c0_3 = arith.constant 0 : index
    %12 = vector.load %arg2[%11, %c0_3] : memref<50x32xf32, #tpu.memory_space<vmem>>, vector<1x32xf32>
    %c1 = arith.constant 1 : index
    %c0_4 = arith.constant 0 : index
    %13 = vector.load %arg5[%c1, %c0_4] : memref<8x32xf32, #tpu.memory_space<vmem>>, vector<1x32xf32>
    tpu.vector_store %arg5[%c1, %c0_4], %12 {strides = array<i32>} : memref<8x32xf32, #tpu.memory_space<vmem>>, vector<1x32xf32>,
    %c2_i32 = arith.constant 2 : i32
    %14 = arith.addi %1, %c2_i32 : i32
    %15 = arith.index_cast %14 : i32 to index
    %16 = memref.load %arg1[%15] : memref<16xi32, #tpu.memory_space<smem>>
    %17 = arith.index_cast %16 : i32 to index
    %c0_5 = arith.constant 0 : index
    %18 = vector.load %arg2[%17, %c0_5] : memref<50x32xf32, #tpu.memory_space<vmem>>, vector<1x32xf32>
    %c2 = arith.constant 2 : index
    %c0_6 = arith.constant 0 : index
    %19 = vector.load %arg5[%c2, %c0_6] : memref<8x32xf32, #tpu.memory_space<vmem>>, vector<1x32xf32>
    tpu.vector_store %arg5[%c2, %c0_6], %18 {strides = array<i32>} : memref<8x32xf32, #tpu.memory_space<vmem>>, vector<1x32xf32>,
    %c3_i32 = arith.constant 3 : i32
    %20 = arith.addi %1, %c3_i32 : i32
    %21 = arith.index_cast %20 : i32 to index
    %22 = memref.load %arg1[%21] : memref<16xi32, #tpu.memory_space<smem>>
    %23 = arith.index_cast %22 : i32 to index
    %c0_7 = arith.constant 0 : index
    %24 = vector.load %arg2[%23, %c0_7] : memref<50x32xf32, #tpu.memory_space<vmem>>, vector<1x32xf32>
    %c3 = arith.constant 3 : index
    %c0_8 = arith.constant 0 : index
    %25 = vector.load %arg5[%c3, %c0_8] : memref<8x32xf32, #tpu.memory_space<vmem>>, vector<1x32xf32>
    tpu.vector_store %arg5[%c3, %c0_8], %24 {strides = array<i32>} : memref<8x32xf32, #tpu.memory_space<vmem>>, vector<1x32xf32>,
    %c4_i32 = arith.constant 4 : i32
    %26 = arith.addi %1, %c4_i32 : i32
    %27 = arith.index_cast %26 : i32 to index
    %28 = memref.load %arg1[%27] : memref<16xi32, #tpu.memory_space<smem>>
    %29 = arith.index_cast %28 : i32 to index
    %c0_9 = arith.constant 0 : index
    %30 = vector.load %arg2[%29, %c0_9] : memref<50x32xf32, #tpu.memory_space<vmem>>, vector<1x32xf32>
    %c4 = arith.constant 4 : index
    %c0_10 = arith.constant 0 : index
    %31 = vector.load %arg5[%c4, %c0_10] : memref<8x32xf32, #tpu.memory_space<vmem>>, vector<1x32xf32>
    tpu.vector_store %arg5[%c4, %c0_10], %30 {strides = array<i32>} : memref<8x32xf32, #tpu.memory_space<vmem>>, vector<1x32xf32>,
    %c5_i32 = arith.constant 5 : i32
    %32 = arith.addi %1, %c5_i32 : i32
    %33 = arith.index_cast %32 : i32 to index
    %34 = memref.load %arg1[%33] : memref<16xi32, #tpu.memory_space<smem>>
    %35 = arith.index_cast %34 : i32 to index
    %c0_11 = arith.constant 0 : index
    %36 = vector.load %arg2[%35, %c0_11] : memref<50x32xf32, #tpu.memory_space<vmem>>, vector<1x32xf32>
    %c5 = arith.constant 5 : index
    %c0_12 = arith.constant 0 : index
    %37 = vector.load %arg5[%c5, %c0_12] : memref<8x32xf32, #tpu.memory_space<vmem>>, vector<1x32xf32>
    tpu.vector_store %arg5[%c5, %c0_12], %36 {strides = array<i32>} : memref<8x32xf32, #tpu.memory_space<vmem>>, vector<1x32xf32>,
    %c6_i32 = arith.constant 6 : i32
    %38 = arith.addi %1, %c6_i32 : i32
    %39 = arith.index_cast %38 : i32 to index
    %40 = memref.load %arg1[%39] : memref<16xi32, #tpu.memory_space<smem>>
    %41 = arith.index_cast %40 : i32 to index
    %c0_13 = arith.constant 0 : index
    %42 = vector.load %arg2[%41, %c0_13] : memref<50x32xf32, #tpu.memory_space<vmem>>, vector<1x32xf32>
    %c6 = arith.constant 6 : index
    %c0_14 = arith.constant 0 : index
    %43 = vector.load %arg5[%c6, %c0_14] : memref<8x32xf32, #tpu.memory_space<vmem>>, vector<1x32xf32>
    tpu.vector_store %arg5[%c6, %c0_14], %42 {strides = array<i32>} : memref<8x32xf32, #tpu.memory_space<vmem>>, vector<1x32xf32>,
    %c7_i32 = arith.constant 7 : i32
    %44 = arith.addi %1, %c7_i32 : i32
    %45 = arith.index_cast %44 : i32 to index
    %46 = memref.load %arg1[%45] : memref<16xi32, #tpu.memory_space<smem>>
    %47 = arith.index_cast %46 : i32 to index
    %c0_15 = arith.constant 0 : index
    %48 = vector.load %arg2[%47, %c0_15] : memref<50x32xf32, #tpu.memory_space<vmem>>, vector<1x32xf32>
    %c7 = arith.constant 7 : index
    %c0_16 = arith.constant 0 : index
    %49 = vector.load %arg5[%c7, %c0_16] : memref<8x32xf32, #tpu.memory_space<vmem>>, vector<1x32xf32>
    tpu.vector_store %arg5[%c7, %c0_16], %48 {strides = array<i32>} : memref<8x32xf32, #tpu.memory_space<vmem>>, vector<1x32xf32>,
    %c0_17 = arith.constant 0 : index
    %c0_18 = arith.constant 0 : index
    %50 = vector.load %arg3[%c0_17, %c0_18] : memref<8x32xf32, #tpu.memory_space<vmem>>, vector<8x32xf32>
    %c0_19 = arith.constant 0 : index
    %c0_20 = arith.constant 0 : index
    %51 = vector.load %arg5[%c0_19, %c0_20] : memref<8x32xf32, #tpu.memory_space<vmem>>, vector<8x32xf32>
    %52 = arith.addf %51, %50 : vector<8x32xf32>
    %c0_21 = arith.constant 0 : index
    %c0_22 = arith.constant 0 : index
    %c0_23 = arith.constant 0 : index
    %53 = vector.load %arg4[%c0_21, %c0_22, %c0_23] : memref<1x8x32xf32, #tpu.memory_space<vmem>>, vector<1x8x32xf32>
    %54 = vector.shape_cast %53 : vector<1x8x32xf32> to vector<8x32xf32>
    %55 = vector.shape_cast %52 : vector<8x32xf32> to vector<1x8x32xf32>
    tpu.vector_store %arg4[%c0_21, %c0_22, %c0_23], %55 {strides = array<i32>} : memref<1x8x32xf32, #tpu.memory_space<vmem>>, vector<1x8x32xf32>,
    return
  }
  func.func @transform_0(%arg0: i32, %arg1: memref<16xi32, #tpu.memory_space<smem>>) -> (i32, i32) {
    %c0_i32 = arith.constant 0 : i32
    %c0_i32_0 = arith.constant 0 : i32
    %c0_i32_1 = arith.constant 0 : i32
    return %c0_i32, %c0_i32_0 : i32, i32
  }
  func.func @transform_1(%arg0: i32, %arg1: memref<16xi32, #tpu.memory_space<smem>>) -> (i32, i32) {
    %c0_i32 = arith.constant 0 : i32
    %c0_i32_0 = arith.constant 0 : i32
    %c0_i32_1 = arith.constant 0 : i32
    return %c0_i32, %c0_i32_0 : i32, i32
  }
  func.func @transform_2(%arg0: i32, %arg1: memref<16xi32, #tpu.memory_space<smem>>) -> (i32, i32, i32) {
    %c0_i32 = arith.constant 0 : i32
    %c0_i32_0 = arith.constant 0 : i32
    %c0_i32_1 = arith.constant 0 : i32
    return %arg0, %c0_i32, %c0_i32_0 : i32, i32, i32
  }
}

</mosaic_0001>

<llo_original>
// kernel: tpu_custom_call.1
$region0: #{tpu_custom_call.1}
  #allocation0 [shape = 'u32[]', space=smem, size = 0x4, offset = 0x4, fixed_abs, tag = 'smem constant byte address 0x4 - core index']
  #allocation1 [shape = 'u32[72,128]{1,0:T(1,128)}', space=vmem, size = 0x9000, scoped, tag = 'internal scratch']
  #allocation2 [shape = 'f32[8,32]{1,0:T(8,128)}', space=vmem, size = 0x1000, scoped, tag = 'scratch operand']
  #allocation3 [shape = 's32[1]{0}', space=sflag, size = 0x4, scoped, tag = 'scoped memory for tpu_custom_call.1']
  #allocation4 [shape = 'u8[512]{0}', space=smem, size = 0x200, scoped, tag = 'prefetched SMEM operand 0']
  %s0 = inlined_call_operand.vmem [shape: s32[16], index: 0, kind: input, shape index: {}]
  %s1 = inlined_call_operand.vmem [shape: f32[50,32], index: 1, kind: input, shape index: {}]
  %s2 = inlined_call_operand.vmem [shape: f32[8,32], index: 2, kind: input, shape index: {}]
  %s3 = inlined_call_operand.hbm [shape: f32[2,8,32], index: 3, kind: output, shape index: {}]
  %s4 = sld [smem:[#allocation0]]
  $region41: #{tpu_custom_call.1} parent=0
    _
  %s6 = ssub.s32 1, %s4
  %s7 = scalar_select 0, %s6, %s4
  %s9 = sshll.u32 %s0, 4
  %s10 = int_to_ptr.vmem [resolvable:$true] %s9
  %12 = dma.vmem_to_smem %s10, 16, [#allocation4], [#allocation3]
  %14 = dma.done [#allocation3], 16
  %15 = sfence
  $region1: #{tpu_custom_call.1} parent=0
    #allocation5 [shape = 'u8[8192]{0}', space=vmem, size = 0x2000, scoped, tag = 'output window, operand 0']
    #allocation6 [shape = 's32[2]{0}', space=sflag, size = 0x8, scoped, tag = 'scoped memory for tpu_custom_call.1']
    %16 = vsyncpa [#allocation6], 0
    %s17 = scalar_lea.sflag [#allocation6], 1
    %18 = vsyncpa %s17, 0
    loop: start=0, step=1, limit=4
    $region2: #{tpu_custom_call.1} parent=1 // loop_pre_header
      _
    $region3: #{tpu_custom_call.1} parent=1 // loop_header
      %s20 = sphi 0, %s24
      %p21 = scmp.ge.s32.totalorder %s20, 4
      %s28 = sphi 0, %s28
      %s30 = sphi 0, %s28
      %s31 = sphi 0, %s30
      %s45 = sphi 0, %s31
      %s49 = sphi 0, %s49
      %s51 = sphi 0, %s49
      %s52 = sphi 0, %s51
      %s66 = sphi 0, %s52
      %s72 = sphi 0, %s74
      %s75 = sphi 0, %s72
      %s76 = sphi 0, %s75
      %s92 = sphi 0, %s76
    $region4: #{tpu_custom_call.1} parent=1 // loop_header_branch
      %23 = sbr.rel (%p21) target = $region8
    $region5: #{tpu_custom_call.1} parent=1 // loop_body
      %s25 = ssub.s32 %s20, 1
      %s26 = ssub.s32 %s20, 2
      %s27 = sadd.s32 %s20, 1
      %s29 = sadd.s32 %s28, 1
      %p32 = scmp.eq.s32.totalorder %s20, 1
      %p33 = scmp.ne.s32.totalorder %s28, %s30
      %p34 = scmp.eq.s32.totalorder %s20, 0
      %p35 = por %p33, %p34
      %p36 = scmp.ne.s32.totalorder %s28, %s30
      %p37 = scmp.eq.s32.totalorder %s25, 1
      %p38 = por %p36, %p37
      %p39 = scmp.ne.s32.totalorder %s30, %s31
      %p40 = scmp.eq.s32.totalorder %s25, 0
      %p41 = por %p39, %p40
      %p42 = scmp.ne.s32.totalorder %s30, %s31
      %p43 = scmp.eq.s32.totalorder %s26, 1
      %p44 = por %p42, %p43
      %p46 = scmp.ne.s32.totalorder %s31, %s45
      %p47 = scmp.eq.s32.totalorder %s26, 0
      %p48 = por %p46, %p47
      %s50 = sadd.s32 %s49, 1
      %p53 = scmp.eq.s32.totalorder %s20, 1
      %p54 = scmp.ne.s32.totalorder %s49, %s51
      %p55 = scmp.eq.s32.totalorder %s20, 0
      %p56 = por %p54, %p55
      %p57 = scmp.ne.s32.totalorder %s49, %s51
      %p58 = scmp.eq.s32.totalorder %s25, 1
      %p59 = por %p57, %p58
      %p60 = scmp.ne.s32.totalorder %s51, %s52
      %p61 = scmp.eq.s32.totalorder %s25, 0
      %p62 = por %p60, %p61
      %p63 = scmp.ne.s32.totalorder %s51, %s52
      %p64 = scmp.eq.s32.totalorder %s26, 1
      %p65 = por %p63, %p64
      %p67 = scmp.ne.s32.totalorder %s52, %s66
      %p68 = scmp.eq.s32.totalorder %s26, 0
      %p69 = por %p67, %p68
      %s70 = ssub.s32 %s20, %s27
      %p71 = scmp.eq.s32.totalorder %s70, 0
      %s73 = sadd.s32 %s72, 1
      %s74 = scalar_select %p71, %s72, %s73
      %p77 = pneg %p71
      %p78 = scmp.eq.s32.totalorder %s20, 1
      %p79 = por %p77, %p78
      %p80 = scmp.ne.s32.totalorder %s72, %s75
      %p81 = scmp.eq.s32.totalorder %s20, 0
      %p82 = por %p80, %p81
      %p83 = scmp.ne.s32.totalorder %s72, %s75
      %p84 = scmp.eq.s32.totalorder %s25, 1
      %p85 = por %p83, %p84
      %p86 = scmp.ne.s32.totalorder %s75, %s76
      %p87 = scmp.eq.s32.totalorder %s25, 0
      %p88 = por %p86, %p87
      %p89 = scmp.ne.s32.totalorder %s75, %s76
      %p90 = scmp.eq.s32.totalorder %s26, 1
      %p91 = por %p89, %p90
      %p93 = scmp.ne.s32.totalorder %s76, %s92
      %p94 = scmp.eq.s32.totalorder %s26, 0
      %p95 = por %p93, %p94
      %p96 = scmp.le.s32.totalorder 1, %s20
      %p97 = scmp.lt.s32.totalorder %s20, 3
      %p98 = pnand %p96, %p97
      %p99 = pneg %p98
      // Predicated region
      $region9: #{tpu_custom_call.1} parent=5 // pred_check
        _
      $region10: #{tpu_custom_call.1} parent=5 // pred_check_branch
        %101 = sbr.rel (%p98) target = $region12
      $region11: #{tpu_custom_call.1} parent=5 // pred_region
        %s102 = ssub.s32 %s20, 1
        // Predicated region
        $region13: #{tpu_custom_call.1} parent=11 // pred_check
          %p103 = pneg %p41
        $region14: #{tpu_custom_call.1} parent=11 // pred_check_branch
          %105 = sbr.rel (%p103) target = $region16
        $region15: #{tpu_custom_call.1} parent=11 // pred_region
          _
        $region16: #{tpu_custom_call.1} parent=11 // pred_fallthru
          _
        // Predicated region
        $region17: #{tpu_custom_call.1} parent=11 // pred_check
          %p106 = pneg %p62
        $region18: #{tpu_custom_call.1} parent=11 // pred_check_branch
          %108 = sbr.rel (%p106) target = $region20
        $region19: #{tpu_custom_call.1} parent=11 // pred_region
          _
        $region20: #{tpu_custom_call.1} parent=11 // pred_fallthru
          _
      $region12: #{tpu_custom_call.1} parent=5 // pred_fallthru
        _
      %p109 = scmp.lt.s32.totalorder %s20, 2
      // Predicated region
      $region21: #{tpu_custom_call.1} parent=5 // pred_check
        %p110 = pneg %p109
      $region22: #{tpu_custom_call.1} parent=5 // pred_check_branch
        %112 = sbr.rel (%p110) target = $region24
      $region23: #{tpu_custom_call.1} parent=5 // pred_region
        _
      $region24: #{tpu_custom_call.1} parent=5 // pred_fallthru
        _
      %p113 = scmp.le.s32.totalorder 1, %s20
      %p114 = scmp.lt.s32.totalorder %s20, 3
      %p115 = pnand %p113, %p114
      %p116 = pneg %p115
      // Predicated region
      $region25: #{tpu_custom_call.1} parent=5 // pred_check
        _
      $region26: #{tpu_custom_call.1} parent=5 // pred_check_branch
        %118 = sbr.rel (%p115) target = $region28
      $region27: #{tpu_custom_call.1} parent=5 // pred_region
        %s119 = ssub.s32 %s20, 1
        %p120 = pneg %p41
        %p121 = pneg %p38
        %p122 = pneg %p62
        %p123 = pneg %p59
        %p124 = pneg %p88
        %p125 = pneg %p85
        %s126 = sand.u32 %s75, 1
        %s127 = scalar_lea.sflag [#allocation6], %s126
        %s128 = sand.u32 %s75, 1
        %s129 = smul.addr %s128, 8
        %s130 = scalar_lea.vmem [#allocation5], %s129
        %s131 = smul.u32 %s25, 8
        %s132 = sld [smem:[#allocation4 + %s131]]
        %s133 = scalar_lea.vmem %s1, %s132
        %v134 = vld [vmem:[%s133] sm:$0x1]
        %vm135 = vcmask 253952
        %136 = vst.msk [vmem:[#allocation2] sm:$0x1] %vm135, %v134
        %s137 = sadd.s32 %s131, 1
        %s138 = sld [smem:[#allocation4 + %s137]]
        %s139 = scalar_lea.vmem %s1, %s138
        %v140 = vld [vmem:[%s139] sm:$0x1]
        %141 = vst.msk [vmem:[#allocation2 + $0x1] sm:$0x1] %vm135, %v140
        %s142 = sadd.s32 %s131, 2
        %s143 = sld [smem:[#allocation4 + %s142]]
        %s144 = scalar_lea.vmem %s1, %s143
        %v145 = vld [vmem:[%s144] sm:$0x1]
        %146 = vst.msk [vmem:[#allocation2 + $0x2] sm:$0x1] %vm135, %v145
        %s147 = sadd.s32 %s131, 3
        %s148 = sld [smem:[#allocation4 + %s147]]
        %s149 = scalar_lea.vmem %s1, %s148
        %v150 = vld [vmem:[%s149] sm:$0x1]
        %151 = vst.msk [vmem:[#allocation2 + $0x3] sm:$0x1] %vm135, %v150
        %s152 = sadd.s32 %s131, 4
        %s153 = sld [smem:[#allocation4 + %s152]]
        %s154 = scalar_lea.vmem %s1, %s153
        %v155 = vld [vmem:[%s154] sm:$0x1]
        %156 = vst.msk [vmem:[#allocation2 + $0x4] sm:$0x1] %vm135, %v155
        %s157 = sadd.s32 %s131, 5
        %s158 = sld [smem:[#allocation4 + %s157]]
        %s159 = scalar_lea.vmem %s1, %s158
        %v160 = vld [vmem:[%s159] sm:$0x1]
        %161 = vst.msk [vmem:[#allocation2 + $0x5] sm:$0x1] %vm135, %v160
        %s162 = sadd.s32 %s131, 6
        %s163 = sld [smem:[#allocation4 + %s162]]
        %s164 = scalar_lea.vmem %s1, %s163
        %v165 = vld [vmem:[%s164] sm:$0x1]
        %166 = vst.msk [vmem:[#allocation2 + $0x6] sm:$0x1] %vm135, %v165
        %s167 = sadd.s32 %s131, 7
        %s168 = sld [smem:[#allocation4 + %s167]]
        %s169 = scalar_lea.vmem %s1, %s168
        %v170 = vld [vmem:[%s169] sm:$0x1]
        %171 = vst.msk [vmem:[#allocation2 + $0x7] sm:$0x1] %vm135, %v170
        %v172 = vld [vmem:[%s2] sm:$0xff]
        %v173 = vld [vmem:[#allocation2] sm:$0xff]
        %v174 = vadd.f32 %v173, %v172
        %vm175 = vcmask 261120
        %176 = vst.msk [vmem:[%s130] sm:$0xff] %vm175, %v174
        %s177 = sand.u32 %s75, 1
        %s178 = scalar_lea.sflag [#allocation6], %s177
        %s179 = sand.u32 %s75, 1
        %s180 = smul.addr %s179, 8
        %s181 = scalar_lea.vmem [#allocation5], %s180
        // Predicated region
        $region29: #{tpu_custom_call.1} parent=27 // pred_check
          %p182 = pneg %p85
        $region30: #{tpu_custom_call.1} parent=27 // pred_check_branch
          %184 = sbr.rel (%p182) target = $region32
        $region31: #{tpu_custom_call.1} parent=27 // pred_region
          %186 = vsyncadd %s178, 0
          %s187 = smul.addr %s25, 8
          %s188 = scalar_lea.hbm %s3, %s187
          %s190 = sshll.u32 %s181, 4
          %s191 = int_to_ptr.vmem [resolvable:$true] %s190
          %s192 = sshll.u32 %s188, 4
          %s193 = int_to_ptr.hbm [resolvable:$true] %s192
          %195 = dma.vmem_to_hbm [thread:$0]  %s191, 128, %s193, %s178
        $region32: #{tpu_custom_call.1} parent=27 // pred_fallthru
          _
      $region28: #{tpu_custom_call.1} parent=5 // pred_fallthru
        _
      %p196 = scmp.le.s32.totalorder 2, %s20
      // Predicated region
      $region33: #{tpu_custom_call.1} parent=5 // pred_check
        %p197 = pneg %p196
      $region34: #{tpu_custom_call.1} parent=5 // pred_check_branch
        %199 = sbr.rel (%p197) target = $region36
      $region35: #{tpu_custom_call.1} parent=5 // pred_region
        %s200 = ssub.s32 %s20, 2
        // Predicated region
        $region37: #{tpu_custom_call.1} parent=35 // pred_check
          %p201 = pneg %p91
        $region38: #{tpu_custom_call.1} parent=35 // pred_check_branch
          %203 = sbr.rel (%p201) target = $region40
        $region39: #{tpu_custom_call.1} parent=35 // pred_region
          %s204 = sand.u32 %s76, 1
          %s205 = scalar_lea.sflag [#allocation6], %s204
          %s206 = sand.u32 %s76, 1
          %s207 = smul.addr %s206, 8
          %s208 = scalar_lea.vmem [#allocation5], %s207
          %210 = dma.done %s205, 128
        $region40: #{tpu_custom_call.1} parent=35 // pred_fallthru
          _
      $region36: #{tpu_custom_call.1} parent=5 // pred_fallthru
        _
    $region6: #{tpu_custom_call.1} parent=1 // loop_footer
      %s24 = sadd.s32 1, %s20
    $region7: #{tpu_custom_call.1} parent=1 // loop_footer_branch
      %19 = sbr.rel target = $region3
    $region8: #{tpu_custom_call.1} parent=1 // loop_exit
      _
    %211 = vsyncpa [#allocation6], 1
    %s212 = scalar_lea.sflag [#allocation6], 1
    %213 = vsyncpa %s212, 1

</llo_original>
